<compile_context>
chip_gen: v7x
topology: tpu7x:2x2x1
jax: 0.10.0
libtpu: 0.0.40
codegen_flags: <defaults>
</compile_context>

<pallas_src>
import jax
import jax.numpy as jnp
from jax.experimental import pallas as pl
from jax.experimental.pallas import tpu as pltpu

NB_STATES = 3    # Pendulum-v0 observation_space.shape[0]
NB_ACTIONS = 1   # Pendulum-v0 action_space.shape[0]
H1 = 400
H2 = 300

LANE = 128
SUBLANE = 8


def _round_up(x, m):
    return (x + m - 1) // m * m


def _cdiv(a, b):
    return (a + b - 1) // b


H1P = _round_up(H1, LANE)          # 512
H2P = _round_up(H2, LANE)          # 384
SA_DIM = 16                        # [state | action | zeros] padded input width
                                   # (16 keeps the bf16 fc1 RHS sublane-aligned)

assert NB_STATES + NB_ACTIONS <= SA_DIM
assert H1 + 2 * NB_ACTIONS <= H1P


# ---------------------------------------------------------------------------
# Kernel: the whole forward pass, three MXU matmuls per batch tile.
# ---------------------------------------------------------------------------
def critic_kernel(sa_ref, w1_ref, b1_ref, w2_ref, b2_ref, w3_ref, b3_ref,
                  q_ref):
    # fc1 (+ action pass-through columns) on the MXU. sa = [state|action|0...]
    sa = sa_ref[...].astype(jnp.bfloat16)                       # [TB, 16]
    x = jnp.dot(sa, w1_ref[...],
                preferred_element_type=jnp.float32)             # [TB, 512]
    # Padded bias columns (incl. 400/401) are zero, so relu leaves the
    # action pass-through pair relu(a), relu(-a) intact.
    x = jnp.maximum(x + b1_ref[...], 0.0)

    # fc2 on the MXU. Rows 400/401 of w2 hold +w2a/-w2a, so the action
    # contribution a @ w2a == relu(a)*w2a - relu(-a)*w2a is included exactly.
    h = jnp.dot(x.astype(jnp.bfloat16), w2_ref[...],
                preferred_element_type=jnp.float32)             # [TB, 384]
    h = jnp.maximum(h + b2_ref[...], 0.0)

    # fc3 on the MXU: w3 lives in lane column 0 of a [384, 128] tile, so the
    # result (and the HBM writeback) is a lane-dense [TB, 128] block.
    q = jnp.dot(h.astype(jnp.bfloat16), w3_ref[...],
                preferred_element_type=jnp.float32)             # [TB, 128]
    q_ref[...] = q + b3_ref[...]                                # col 0 is q


# ---------------------------------------------------------------------------
# Parameter packing (zero-pad to lane multiples, fold concat + action, bf16)
# ---------------------------------------------------------------------------
def prepare_kernel_params(params):
    w1, b1, w2x, w2a, b2, w3, b3 = params

    # fc1 weight: rows 0..2 = state weights; row 3 is the action pass-through
    # (+1 into col 400, -1 into col 401 so relu(a) - relu(-a) == a).
    w1p = jnp.zeros((SA_DIM, H1P), jnp.float32)
    w1p = w1p.at[:NB_STATES, :H1].set(w1)
    b1p = jnp.zeros((1, H1P), jnp.float32).at[:, :H1].set(b1)

    # fc2 weight: rows 0..399 multiply x; rows 400/401 multiply relu(±a).
    w2p = jnp.zeros((H1P, H2P), jnp.float32)
    w2p = w2p.at[:H1, :H2].set(w2x)
    for k in range(NB_ACTIONS):
        w1p = w1p.at[NB_STATES + k, H1 + 2 * k].set(1.0)
        w1p = w1p.at[NB_STATES + k, H1 + 2 * k + 1].set(-1.0)
        w2p = w2p.at[H1 + 2 * k, :H2].set(w2a[k])
        w2p = w2p.at[H1 + 2 * k + 1, :H2].set(-w2a[k])
    b2p = jnp.zeros((1, H2P), jnp.float32).at[:, :H2].set(b2)

    # fc3 weight in lane column 0 of a [H2P, 128] tile (lane-dense output).
    w3p = jnp.zeros((H2P, LANE), jnp.float32).at[:H2, 0].set(w3[:, 0])
    b3p = b3.reshape(1, 1).astype(jnp.float32)

    return (w1p.astype(jnp.bfloat16), b1p, w2p.astype(jnp.bfloat16),
            b2p, w3p.astype(jnp.bfloat16), b3p)


# ---------------------------------------------------------------------------
# Wrapper
# ---------------------------------------------------------------------------
def critic_forward(state, action, kparams, *, tb_max=512):
    """state: [B, nb_states], action: [B, nb_actions] -> q: [B, 1]"""
    w1p, b1p, w2p, b2p, w3p, b3p = kparams
    B = state.shape[0]

    # Balanced batch tiles: cap at tb_max, prefer >=2 tiles (v7x megacore),
    # and size tiles so the last one isn't mostly padding (B=300 -> 2x152).
    n_tiles = max(_cdiv(B, tb_max), min(2, _cdiv(B, SUBLANE)))
    tb = _round_up(_cdiv(B, n_tiles), SUBLANE)
    Bp = n_tiles * tb

    # One combined [state | action | zeros] input tile per step.
    sa = jnp.concatenate([state, action], axis=1).astype(jnp.float32)
    sa = jnp.pad(sa, ((0, Bp - B), (0, SA_DIM - (NB_STATES + NB_ACTIONS))))

    def const_spec(shape):
        # Same block index every step -> DMA'd once, stays resident in VMEM.
        return pl.BlockSpec(shape, lambda i: (0, 0))

    flops = 2 * Bp * (SA_DIM * H1P + H1P * H2P + H2P * LANE)
    weight_bytes = ((w1p.size + w2p.size + w3p.size) * 2
                    + (b1p.size + b2p.size + b3p.size) * 4)
    bytes_accessed = weight_bytes + Bp * (SA_DIM + LANE) * 4

    out = pl.pallas_call(
        critic_kernel,
        out_shape=jax.ShapeDtypeStruct((Bp, LANE), jnp.float32),
        grid=(n_tiles,),
        in_specs=[
            pl.BlockSpec((tb, SA_DIM), lambda i: (i, 0)),   # [state|action]
            const_spec((SA_DIM, H1P)),                      # w1 (bf16)
            const_spec((1, H1P)),                           # b1
            const_spec((H1P, H2P)),                         # w2 (bf16)
            const_spec((1, H2P)),                           # b2
            const_spec((H2P, LANE)),                        # w3 (bf16, col 0)
            const_spec((1, 1)),                             # b3
        ],
        out_specs=pl.BlockSpec((tb, LANE), lambda i: (i, 0)),
        compiler_params=pltpu.CompilerParams(
            dimension_semantics=("parallel",)),
        cost_estimate=pl.CostEstimate(
            flops=flops, transcendentals=0, bytes_accessed=bytes_accessed),
    )(sa, w1p, b1p, w2p, b2p, w3p, b3p)

    return out[:B, 0:1]


# ---------------------------------------------------------------------------
# Init + references
# ---------------------------------------------------------------------------
def init_params(key):
    """Deterministic init mimicking nn.Linear default (U[-1/sqrt(fan_in), ..]).

    Weights are stored as [in_features, out_features] (transposed vs PyTorch)
    so y = x @ W + b.
    """
    ks = jax.random.split(key, 6)

    def unif(k, shape, fan_in):
        bound = 1.0 / jnp.sqrt(jnp.float32(fan_in))
        return jax.random.uniform(k, shape, jnp.float32, -bound, bound)

    w1 = unif(ks[0], (NB_STATES, H1), NB_STATES)          # fc1.weight^T
    b1 = unif(ks[1], (1, H1), NB_STATES)                  # fc1.bias
    fan2 = NB_ACTIONS + H1
    w2 = unif(ks[2], (fan2, H2), fan2)                    # fc2.weight^T
    w2x = w2[:H1, :]                                      # multiplies x
    w2a = w2[H1:, :]                                      # multiplies action
    b2 = unif(ks[3], (1, H2), fan2)                       # fc2.bias
    w3 = unif(ks[4], (H2, 1), H2)                         # fc3.weight^T
    b3 = unif(ks[5], (1, 1), H2)                          # fc3.bias
    return (w1, b1, w2x, w2a, b2, w3, b3)


def critic_ref(state, action, params):
    """Pure f32 JAX reference matching the PyTorch forward (explicit concat)."""
    w1, b1, w2x, w2a, b2, w3, b3 = params
    x = jnp.maximum(state @ w1 + b1, 0.0)
    w2_full = jnp.concatenate([w2x, w2a], axis=0)
    xa = jnp.concatenate([x, action], axis=1)
    h = jnp.maximum(xa @ w2_full + b2, 0.0)
    return h @ w3 + b3


def critic_ref_matched(state, action, kparams):
    """Reference replicating the kernel's bf16-MXU math exactly."""
    w1p, b1p, w2p, b2p, w3p, b3p = kparams
    sa = jnp.concatenate([state, action], axis=1).astype(jnp.float32)
    sa = jnp.pad(sa, ((0, 0), (0, SA_DIM - (NB_STATES + NB_ACTIONS))))
    x = jnp.maximum(jnp.dot(sa.astype(jnp.bfloat16), w1p,
                            preferred_element_type=jnp.float32) + b1p, 0.0)
    h = jnp.maximum(jnp.dot(x.astype(jnp.bfloat16), w2p,
                            preferred_element_type=jnp.float32) + b2p, 0.0)
    q = jnp.dot(h.astype(jnp.bfloat16), w3p,
                preferred_element_type=jnp.float32) + b3p
    return q[:, 0:1]


# ---------------------------------------------------------------------------
if __name__ == "__main__":
    key = jax.random.PRNGKey(0)
    k_p, k_s, k_a, k_s2, k_a2 = jax.random.split(key, 5)

    params = init_params(k_p)
    kparams = prepare_kernel_params(params)

    # Small batch (single grid step).
    batch = 8
    state = jax.random.normal(k_s, (batch, NB_STATES), jnp.float32)
    action = jax.random.normal(k_a, (batch, NB_ACTIONS), jnp.float32)

    q = jax.block_until_ready(critic_forward(state, action, kparams))
    assert q.shape == (batch, 1)
    q_f32 = critic_ref(state, action, params)
    q_mat = critic_ref_matched(state, action, kparams)
    assert jnp.allclose(q, q_f32, atol=5e-2, rtol=5e-2), (q, q_f32)
    assert jnp.allclose(q, q_mat, atol=2e-3, rtol=2e-3), (q, q_mat)

    # Larger, non-multiple batch: exercises the balanced 2-tile path (2x152).
    batch2 = 300
    state2 = jax.random.normal(k_s2, (batch2, NB_STATES), jnp.float32)
    action2 = jax.random.normal(k_a2, (batch2, NB_ACTIONS), jnp.float32)

    q2 = jax.block_until_ready(critic_forward(state2, action2, kparams))
    assert q2.shape == (batch2, 1)
    q2_f32 = critic_ref(state2, action2, params)
    q2_mat = critic_ref_matched(state2, action2, kparams)
    assert jnp.allclose(q2, q2_f32, atol=5e-2, rtol=5e-2), (q2, q2_f32)
    assert jnp.allclose(q2, q2_mat, atol=2e-3, rtol=2e-3), (q2, q2_mat)

    print("KERNEL_OK")
</pallas_src>

<mosaic_0001>
module attributes {stable_mosaic.version = 11 : i64} {
  func.func @critic_kernel(%arg0: i32, %arg1: memref<8x16xf32, #tpu.memory_space<vmem>>, %arg2: memref<16x512xbf16, #tpu.memory_space<vmem>>, %arg3: memref<1x512xf32, #tpu.memory_space<vmem>>, %arg4: memref<512x384xbf16, #tpu.memory_space<vmem>>, %arg5: memref<1x384xf32, #tpu.memory_space<vmem>>, %arg6: memref<384x128xbf16, #tpu.memory_space<vmem>>, %arg7: memref<1x1xf32, #tpu.memory_space<vmem>>, %arg8: memref<8x128xf32, #tpu.memory_space<vmem>>) attributes {dimension_semantics = [#tpu.dimension_semantics<parallel>], iteration_bounds = array<i64: 1>, scalar_prefetch = 0 : i64, scratch_operands = 0 : i64, tpu.core_type = #tpu.core_type<tc>, window_params = [{transform_indices = @transform_0, window_bounds = array<i64: 8, 16>}, {pipeline_mode = #tpu.pipeline_mode<synchronous>, transform_indices = @transform_1, window_bounds = array<i64: 16, 512>}, {pipeline_mode = #tpu.pipeline_mode<synchronous>, transform_indices = @transform_2, window_bounds = array<i64: 1, 512>}, {pipeline_mode = #tpu.pipeline_mode<synchronous>, transform_indices = @transform_3, window_bounds = array<i64: 512, 384>}, {pipeline_mode = #tpu.pipeline_mode<synchronous>, transform_indices = @transform_4, window_bounds = array<i64: 1, 384>}, {pipeline_mode = #tpu.pipeline_mode<synchronous>, transform_indices = @transform_5, window_bounds = array<i64: 384, 128>}, {pipeline_mode = #tpu.pipeline_mode<synchronous>, transform_indices = @transform_6, window_bounds = array<i64: 1, 1>}, {transform_indices = @transform_7, window_bounds = array<i64: 8, 128>}]} {
    %c0 = arith.constant 0 : index
    %c0_0 = arith.constant 0 : index
    %0 = vector.load %arg1[%c0, %c0_0] : memref<8x16xf32, #tpu.memory_space<vmem>>, vector<8x16xf32>
    %1 = arith.truncf %0 : vector<8x16xf32> to vector<8x16xbf16>
    %c0_1 = arith.constant 0 : index
    %c0_2 = arith.constant 0 : index
    %2 = vector.load %arg2[%c0_1, %c0_2] : memref<16x512xbf16, #tpu.memory_space<vmem>>, vector<16x512xbf16>
    %cst = arith.constant dense<0.000000e+00> : vector<8x512xf32>
    %3 = tpu.matmul %1, %2, %cst {dimension_numbers = #tpu.dot_dimension_numbers<[1], [0], [0], [1], [0, 0, 1, 1], [], []>} : vector<8x16xbf16>, vector<16x512xbf16>, vector<8x512xf32> -> vector<8x512xf32>
    %c0_3 = arith.constant 0 : index
    %c0_4 = arith.constant 0 : index
    %4 = vector.load %arg3[%c0_3, %c0_4] : memref<1x512xf32, #tpu.memory_space<vmem>>, vector<1x512xf32>
    %5 = vector.broadcast %4 : vector<1x512xf32> to vector<8x512xf32>
    %6 = arith.addf %3, %5 : vector<8x512xf32>
    %cst_5 = arith.constant 0.000000e+00 : f32
    %7 = vector.broadcast %cst_5 : f32 to vector<8x512xf32>
    %8 = arith.maximumf %6, %7 : vector<8x512xf32>
    %9 = arith.truncf %8 : vector<8x512xf32> to vector<8x512xbf16>
    %c0_6 = arith.constant 0 : index
    %c0_7 = arith.constant 0 : index
    %10 = vector.load %arg4[%c0_6, %c0_7] : memref<512x384xbf16, #tpu.memory_space<vmem>>, vector<512x384xbf16>
    %cst_8 = arith.constant dense<0.000000e+00> : vector<8x384xf32>
    %11 = tpu.matmul %9, %10, %cst_8 {dimension_numbers = #tpu.dot_dimension_numbers<[1], [0], [0], [1], [0, 0, 1, 1], [], []>} : vector<8x512xbf16>, vector<512x384xbf16>, vector<8x384xf32> -> vector<8x384xf32>
    %c0_9 = arith.constant 0 : index
    %c0_10 = arith.constant 0 : index
    %12 = vector.load %arg5[%c0_9, %c0_10] : memref<1x384xf32, #tpu.memory_space<vmem>>, vector<1x384xf32>
    %13 = vector.broadcast %12 : vector<1x384xf32> to vector<8x384xf32>
    %14 = arith.addf %11, %13 : vector<8x384xf32>
    %cst_11 = arith.constant 0.000000e+00 : f32
    %15 = vector.broadcast %cst_11 : f32 to vector<8x384xf32>
    %16 = arith.maximumf %14, %15 : vector<8x384xf32>
    %17 = arith.truncf %16 : vector<8x384xf32> to vector<8x384xbf16>
    %c0_12 = arith.constant 0 : index
    %c0_13 = arith.constant 0 : index
    %18 = vector.load %arg6[%c0_12, %c0_13] : memref<384x128xbf16, #tpu.memory_space<vmem>>, vector<384x128xbf16>
    %cst_14 = arith.constant dense<0.000000e+00> : vector<8x128xf32>
    %19 = tpu.matmul %17, %18, %cst_14 {dimension_numbers = #tpu.dot_dimension_numbers<[1], [0], [0], [1], [0, 0, 1, 1], [], []>} : vector<8x384xbf16>, vector<384x128xbf16>, vector<8x128xf32> -> vector<8x128xf32>
    %c0_15 = arith.constant 0 : index
    %c0_16 = arith.constant 0 : index
    %20 = vector.load %arg7[%c0_15, %c0_16] : memref<1x1xf32, #tpu.memory_space<vmem>>, vector<1x1xf32>
    %21 = vector.broadcast %20 : vector<1x1xf32> to vector<8x128xf32>
    %22 = arith.addf %19, %21 : vector<8x128xf32>
    %c0_17 = arith.constant 0 : index
    %c0_18 = arith.constant 0 : index
    %23 = vector.load %arg8[%c0_17, %c0_18] : memref<8x128xf32, #tpu.memory_space<vmem>>, vector<8x128xf32>
    tpu.vector_store %arg8[%c0_17, %c0_18], %22 {strides = array<i32>} : memref<8x128xf32, #tpu.memory_space<vmem>>, vector<8x128xf32>,
    return
  }
  func.func @transform_0(%arg0: i32) -> (i32, i32) {
    %c0_i32 = arith.constant 0 : i32
    %c0_i32_0 = arith.constant 0 : i32
    return %arg0, %c0_i32 : i32, i32
  }
  func.func @transform_1(%arg0: i32) -> (i32, i32) {
    %c0_i32 = arith.constant 0 : i32
    %c0_i32_0 = arith.constant 0 : i32
    %c0_i32_1 = arith.constant 0 : i32
    return %c0_i32, %c0_i32_0 : i32, i32
  }
  func.func @transform_2(%arg0: i32) -> (i32, i32) {
    %c0_i32 = arith.constant 0 : i32
    %c0_i32_0 = arith.constant 0 : i32
    %c0_i32_1 = arith.constant 0 : i32
    return %c0_i32, %c0_i32_0 : i32, i32
  }
  func.func @transform_3(%arg0: i32) -> (i32, i32) {
    %c0_i32 = arith.constant 0 : i32
    %c0_i32_0 = arith.constant 0 : i32
    %c0_i32_1 = arith.constant 0 : i32
    return %c0_i32, %c0_i32_0 : i32, i32
  }
  func.func @transform_4(%arg0: i32) -> (i32, i32) {
    %c0_i32 = arith.constant 0 : i32
    %c0_i32_0 = arith.constant 0 : i32
    %c0_i32_1 = arith.constant 0 : i32
    return %c0_i32, %c0_i32_0 : i32, i32
  }
  func.func @transform_5(%arg0: i32) -> (i32, i32) {
    %c0_i32 = arith.constant 0 : i32
    %c0_i32_0 = arith.constant 0 : i32
    %c0_i32_1 = arith.constant 0 : i32
    return %c0_i32, %c0_i32_0 : i32, i32
  }
  func.func @transform_6(%arg0: i32) -> (i32, i32) {
    %c0_i32 = arith.constant 0 : i32
    %c0_i32_0 = arith.constant 0 : i32
    %c0_i32_1 = arith.constant 0 : i32
    return %c0_i32, %c0_i32_0 : i32, i32
  }
  func.func @transform_7(%arg0: i32) -> (i32, i32) {
    %c0_i32 = arith.constant 0 : i32
    %c0_i32_0 = arith.constant 0 : i32
    return %arg0, %c0_i32 : i32, i32
  }
}

</mosaic_0001>

<llo_original>
// kernel: tpu_custom_call.1
$region0: #{tpu_custom_call.1}
  #allocation0 [shape = 'u32[]', space=smem, size = 0x4, offset = 0x4, fixed_abs, tag = 'smem constant byte address 0x4 - core index']
  #allocation1 [shape = 'u32[144,128]{1,0:T(1,128)}', space=vmem, size = 0x12000, scoped, tag = 'internal scratch']
  #allocation2 [shape = 'f32[1,1]{1,0:T(1,128)S(1)}', space=vmem, size = 0x200, scoped, tag = 'scoped memory for tpu_custom_call.1']
  %s0 = inlined_call_operand.hbm [shape: f32[8,16], index: 0, kind: input, shape index: {}]
  %s1 = inlined_call_operand.hbm [shape: bf16[16,512], index: 1, kind: input, shape index: {}]
  %s2 = inlined_call_operand.vmem [shape: f32[1,512], index: 2, kind: input, shape index: {}]
  %s3 = inlined_call_operand.hbm [shape: bf16[512,384], index: 3, kind: input, shape index: {}]
  %s4 = inlined_call_operand.vmem [shape: f32[1,384], index: 4, kind: input, shape index: {}]
  %s5 = inlined_call_operand.hbm [shape: bf16[384,128], index: 5, kind: input, shape index: {}]
  %s6 = inlined_call_operand.<no memory space> [shape: f32[1,1], index: 6, kind: input, shape index: {}]
  %s7 = inlined_call_operand.hbm [shape: f32[8,128], index: 7, kind: output, shape index: {}]
  %s8 = sld [smem:[#allocation0]]
  $region54: #{tpu_custom_call.1} parent=0
    _
  %s10 = ssub.s32 1, %s8
  %s11 = scalar_select 0, %s10, %s8
  %v12 = vstv %s6
  %13 = vst [vmem:[#allocation2] sm:$0x1] %v12
  $region1: #{tpu_custom_call.1} parent=0
    #allocation3 [shape = 'u8[4096]{0}', space=vmem, size = 0x1000, scoped, tag = 'input window, operand 0, single buffered']
    #allocation4 [shape = 's32[1]{0}', space=sflag, size = 0x4, scoped, tag = 'scoped memory for tpu_custom_call.1']
    #allocation5 [shape = 's32[1]{0}', space=sflag, size = 0x4, scoped, tag = 'scoped memory for tpu_custom_call.1']
    #allocation6 [shape = 'u8[16384]{0}', space=vmem, size = 0x4000, scoped, tag = 'input window, operand 1, single buffered']
    #allocation7 [shape = 's32[1]{0}', space=sflag, size = 0x4, scoped, tag = 'scoped memory for tpu_custom_call.1']
    #allocation8 [shape = 'u8[393216]{0}', space=vmem, size = 0x60000, scoped, tag = 'input window, operand 3, single buffered']
    #allocation9 [shape = 'u8[98304]{0}', space=vmem, size = 0x18000, scoped, tag = 'input window, operand 5, single buffered']
    #allocation10 [shape = 's32[1]{0}', space=sflag, size = 0x4, scoped, tag = 'scoped memory for tpu_custom_call.1']
    #allocation11 [shape = 'u8[4096]{0}', space=vmem, size = 0x1000, scoped, tag = 'output window, operand 0, single buffered']
    %14 = vsyncpa [#allocation4], 0
    %15 = vsyncpa [#allocation7], 0
    %16 = vsyncpa [#allocation10], 0
    %17 = vsyncpa [#allocation5], 0
    // Predicated region
    $region2: #{tpu_custom_call.1} parent=1 // pred_check
      _
    $region3: #{tpu_custom_call.1} parent=1 // pred_check_branch
      %19 = sbr.rel (0) target = $region5
    $region4: #{tpu_custom_call.1} parent=1 // pred_region
      %s21 = ssub.s32 128, 128
      %22 = vsyncadd [#allocation4], %s21
      %s24 = sshll.u32 [#allocation3], 4
      %s25 = int_to_ptr.vmem [resolvable:$true] %s24
      %27 = dma.hbm_to_vmem [thread:$0]  %s0, 128, %s25, [#allocation4]
    $region5: #{tpu_custom_call.1} parent=1 // pred_fallthru
      _
    // Predicated region
    $region6: #{tpu_custom_call.1} parent=1 // pred_check
      _
    $region7: #{tpu_custom_call.1} parent=1 // pred_check_branch
      %29 = sbr.rel (0) target = $region9
    $region8: #{tpu_custom_call.1} parent=1 // pred_region
      %s31 = ssub.s32 512, 512
      %32 = vsyncadd [#allocation7], %s31
      %s33 = sshll.u32 [#allocation6], 4
      %s34 = int_to_ptr.vmem [resolvable:$true] %s33
      %39 = dma.hbm_to_vmem [thread:$0]  %s1, 512, %s34, [#allocation7], 256, 256, 16
    $region9: #{tpu_custom_call.1} parent=1 // pred_fallthru
      _
    // Predicated region
    $region10: #{tpu_custom_call.1} parent=1 // pred_check
      _
    $region11: #{tpu_custom_call.1} parent=1 // pred_check_branch
      %41 = sbr.rel (0) target = $region13
    $region12: #{tpu_custom_call.1} parent=1 // pred_region
      _
    $region13: #{tpu_custom_call.1} parent=1 // pred_fallthru
      _
    // Predicated region
    $region14: #{tpu_custom_call.1} parent=1 // pred_check
      _
    $region15: #{tpu_custom_call.1} parent=1 // pred_check_branch
      %43 = sbr.rel (0) target = $region17
    $region16: #{tpu_custom_call.1} parent=1 // pred_region
      %s45 = ssub.s32 12288, 12288
      %46 = vsyncadd [#allocation7], %s45
      %s47 = sshll.u32 [#allocation8], 4
      %s48 = int_to_ptr.vmem [resolvable:$true] %s47
      %53 = dma.hbm_to_vmem [thread:$0]  %s3, 12288, %s48, [#allocation7], 192, 192, 12
    $region17: #{tpu_custom_call.1} parent=1 // pred_fallthru
      _
    // Predicated region
    $region18: #{tpu_custom_call.1} parent=1 // pred_check
      _
    $region19: #{tpu_custom_call.1} parent=1 // pred_check_branch
      %55 = sbr.rel (0) target = $region21
    $region20: #{tpu_custom_call.1} parent=1 // pred_region
      _
    $region21: #{tpu_custom_call.1} parent=1 // pred_fallthru
      _
    // Predicated region
    $region22: #{tpu_custom_call.1} parent=1 // pred_check
      _
    $region23: #{tpu_custom_call.1} parent=1 // pred_check_branch
      %57 = sbr.rel (0) target = $region25
    $region24: #{tpu_custom_call.1} parent=1 // pred_region
      %s59 = ssub.s32 3072, 3072
      %60 = vsyncadd [#allocation10], %s59
      %s61 = sshll.u32 [#allocation9], 4
      %s62 = int_to_ptr.vmem [resolvable:$true] %s61
      %67 = dma.hbm_to_vmem [thread:$0]  %s5, 3072, %s62, [#allocation10], 64, 64, 4
    $region25: #{tpu_custom_call.1} parent=1 // pred_fallthru
      _
    // Predicated region
    $region26: #{tpu_custom_call.1} parent=1 // pred_check
      _
    $region27: #{tpu_custom_call.1} parent=1 // pred_check_branch
      %69 = sbr.rel (0) target = $region29
    $region28: #{tpu_custom_call.1} parent=1 // pred_region
      _
    $region29: #{tpu_custom_call.1} parent=1 // pred_fallthru
      _
    // Predicated region
    $region30: #{tpu_custom_call.1} parent=1 // pred_check
      _
    $region31: #{tpu_custom_call.1} parent=1 // pred_check_branch
      %71 = sbr.rel (0) target = $region33
    $region32: #{tpu_custom_call.1} parent=1 // pred_region
      %72 = dma.done [#allocation4], 128
    $region33: #{tpu_custom_call.1} parent=1 // pred_fallthru
      _
    // Predicated region
    $region34: #{tpu_custom_call.1} parent=1 // pred_check
      _
    $region35: #{tpu_custom_call.1} parent=1 // pred_check_branch
      %74 = sbr.rel (0) target = $region37
    $region36: #{tpu_custom_call.1} parent=1 // pred_region
      %75 = dma.done [#allocation7], 512
    $region37: #{tpu_custom_call.1} parent=1 // pred_fallthru
      _
    // Predicated region
    $region38: #{tpu_custom_call.1} parent=1 // pred_check
      _
    $region39: #{tpu_custom_call.1} parent=1 // pred_check_branch
      %77 = sbr.rel (0) target = $region41
    $region40: #{tpu_custom_call.1} parent=1 // pred_region
      %78 = dma.done [#allocation7], 12288
    $region41: #{tpu_custom_call.1} parent=1 // pred_fallthru
      _
    // Predicated region
    $region42: #{tpu_custom_call.1} parent=1 // pred_check
      _
    $region43: #{tpu_custom_call.1} parent=1 // pred_check_branch
      %80 = sbr.rel (0) target = $region45
    $region44: #{tpu_custom_call.1} parent=1 // pred_region
      %81 = dma.done [#allocation10], 3072
    $region45: #{tpu_custom_call.1} parent=1 // pred_fallthru
      _
    %v83 = vld [vmem:[#allocation3] sm:$0xff]
    %v84 = vpack.c.bf16 %v83, %v83
    %v85 = vld [vmem:[#allocation6] sm:$0xff]
    %v86 = vld [vmem:[#allocation6 + $0x8] sm:$0xff]
    %v87 = vld [vmem:[#allocation6 + $0x10] sm:$0xff]
    %v88 = vld [vmem:[#allocation6 + $0x18] sm:$0xff]
    %v89 = vld [vmem:[%s2] sm:$0xf]
    %v91 = vlaneseq
    %v92 = vshrl.u32 %v91, 7
    %v93 = vsub.s32 0, %v92
    %v94 = vrot.slane %v89, %v93
    %v95 = vlaneseq
    %v96 = vshrl.u32 %v95, 7
    %v97 = vsub.s32 1, %v96
    %v98 = vrot.slane %v89, %v97
    %v99 = vlaneseq
    %v100 = vshrl.u32 %v99, 7
    %v101 = vsub.s32 2, %v100
    %v102 = vrot.slane %v89, %v101
    %v103 = vlaneseq
    %v104 = vshrl.u32 %v103, 7
    %v105 = vsub.s32 3, %v104
    %v106 = vrot.slane %v89, %v105
    %v115 = vunpack.c.l.b16 %v85
    %v116 = vunpack.c.h.b16 %v85
    %v117 = vunpack.c.l.b16 %v86
    %v118 = vunpack.c.h.b16 %v86
    %v119 = vunpack.c.l.b16 %v87
    %v120 = vunpack.c.h.b16 %v87
    %v121 = vunpack.c.l.b16 %v88
    %v122 = vunpack.c.h.b16 %v88
    %v123 = vpack.c.b16 %v119, %v115
    %v124 = vpack.c.b16 %v120, %v116
    %v125 = vpack.c.b16 %v121, %v117
    %v126 = vpack.c.b16 %v122, %v118
    %vm131 = vcmask 130048
    %v133 = vsel %vm131, %v84, 0
    %135 = vmatprep.subr.bf16.mxu0 %v124
    %136 = vmatpush1.bf16.msra.mxu0 %v123
    %137 = vmatprep.subr.bf16.mxu0 0
    %138 = vmatpush1.bf16.msra.mxu0 0
    %139 = vmatprep.subr.bf16.mxu0 0
    %140 = vmatpush1.bf16.msra.mxu0 0
    %141 = vmatprep.subr.bf16.mxu0 0
    %142 = vmatpush1.bf16.msra.mxu0 0
    %143 = vmatprep.subr.bf16.mxu0 0
    %144 = vmatpush1.bf16.msra.mxu0 0
    %145 = vmatprep.subr.bf16.mxu0 0
    %146 = vmatpush1.bf16.msra.mxu0 0
    %147 = vmatprep.subr.bf16.mxu0 0
    %148 = vmatpush1.bf16.msra.mxu0 0
    %149 = vmatprep.subr.bf16.mxu0 0
    %150 = vmatpush1.bf16.msra.mxu0 0
    %151 = vmatprep.subr.bf16.mxu0 0
    %152 = vmatpush1.bf16.msra.mxu0 0
    %153 = vmatprep.subr.bf16.mxu0 0
    %154 = vmatpush1.bf16.msra.mxu0 0
    %155 = vmatprep.subr.bf16.mxu0 0
    %156 = vmatpush1.bf16.msra.mxu0 0
    %157 = vmatprep.subr.bf16.mxu0 0
    %158 = vmatpush1.bf16.msra.mxu0 0
    %159 = vmatprep.subr.bf16.mxu0 0
    %160 = vmatpush1.bf16.msra.mxu0 0
    %161 = vmatprep.subr.bf16.mxu0 0
    %162 = vmatpush1.bf16.msra.mxu0 0
    %163 = vmatprep.subr.bf16.mxu0 0
    %164 = vmatpush1.bf16.msra.mxu0 0
    %165 = vmatprep.subr.bf16.mxu0 0
    %166 = vmatpush1.bf16.msra.mxu0 0
    %167 = vmatprep.mubr.bf16.mxu0 0
    %168 = vmatmul.mubr.bf16.gmra.mrb[0].mxu0 %v133
    %v169 = vpop.f32.mrb[0].mxu0
    %v170 = vadd.f32 %v94, %v169
    %v171 = vpop.f32.mrb[0].mxu0
    %v172 = vadd.f32 %v98, %v171
    %v173 = vpop.f32.mrb[0].mxu0
    %v174 = vpop.f32.mrb[0].mxu0
    %175 = vdwg.mxu0
    %176 = vmatprep.subr.bf16.mxu0 %v126
    %177 = vmatpush1.bf16.msra.mxu0 %v125
    %178 = vmatprep.subr.bf16.mxu0 0
    %179 = vmatpush1.bf16.msra.mxu0 0
    %180 = vmatprep.subr.bf16.mxu0 0
    %181 = vmatpush1.bf16.msra.mxu0 0
    %182 = vmatprep.subr.bf16.mxu0 0
    %183 = vmatpush1.bf16.msra.mxu0 0
    %184 = vmatprep.subr.bf16.mxu0 0
    %185 = vmatpush1.bf16.msra.mxu0 0
    %186 = vmatprep.subr.bf16.mxu0 0
    %187 = vmatpush1.bf16.msra.mxu0 0
    %188 = vmatprep.subr.bf16.mxu0 0
    %189 = vmatpush1.bf16.msra.mxu0 0
    %190 = vmatprep.subr.bf16.mxu0 0
    %191 = vmatpush1.bf16.msra.mxu0 0
    %192 = vmatprep.subr.bf16.mxu0 0
    %193 = vmatpush1.bf16.msra.mxu0 0
    %194 = vmatprep.subr.bf16.mxu0 0
    %195 = vmatpush1.bf16.msra.mxu0 0
    %196 = vmatprep.subr.bf16.mxu0 0
    %197 = vmatpush1.bf16.msra.mxu0 0
    %198 = vmatprep.subr.bf16.mxu0 0
    %199 = vmatpush1.bf16.msra.mxu0 0
    %200 = vmatprep.subr.bf16.mxu0 0
    %201 = vmatpush1.bf16.msra.mxu0 0
    %202 = vmatprep.subr.bf16.mxu0 0
    %203 = vmatpush1.bf16.msra.mxu0 0
    %204 = vmatprep.subr.bf16.mxu0 0
    %205 = vmatpush1.bf16.msra.mxu0 0
    %206 = vmatprep.subr.bf16.mxu0 0
    %207 = vmatpush1.bf16.msra.mxu0 0
    %208 = vmatprep.mubr.bf16.mxu0 0
    %209 = vmatmul.mubr.bf16.gmra.mrb[0].mxu0 %v133
    %v210 = vpop.f32.mrb[0].mxu0
    %v211 = vadd.f32 %v102, %v210
    %v212 = vpop.f32.mrb[0].mxu0
    %v213 = vadd.f32 %v106, %v212
    %v214 = vpop.f32.mrb[0].mxu0
    %v215 = vpop.f32.mrb[0].mxu0
    %216 = vdwg.mxu0
    %v217 = vmax.f32 %v170, 0.0
    %v218 = vmax.f32 %v172, 0.0
    %v219 = vmax.f32 %v211, 0.0
    %v220 = vmax.f32 %v213, 0.0
    %v221 = vpack.c.bf16 %v217, %v217
    %v222 = vpack.c.bf16 %v218, %v218
    %v223 = vpack.c.bf16 %v219, %v219
    %v224 = vpack.c.bf16 %v220, %v220
    %v225 = vld [vmem:[#allocation8] sm:$0xff]
    %v226 = vld [vmem:[#allocation8 + $0x8] sm:$0xf]
    %v227 = vld [vmem:[#allocation8 + $0xc] sm:$0xff]
    %v228 = vld [vmem:[#allocation8 + $0x14] sm:$0xf]
    %v229 = vld [vmem:[#allocation8 + $0x18] sm:$0xff]
    %v230 = vld [vmem:[#allocation8 + $0x20] sm:$0xf]
    %v231 = vld [vmem:[#allocation8 + $0x24] sm:$0xff]
    %v232 = vld [vmem:[#allocation8 + $0x2c] sm:$0xf]
    %v233 = vld [vmem:[#allocation8 + $0x30] sm:$0xff]
    %v234 = vld [vmem:[#allocation8 + $0x38] sm:$0xf]
    %v235 = vld [vmem:[#allocation8 + $0x3c] sm:$0xff]
    %v236 = vld [vmem:[#allocation8 + $0x44] sm:$0xf]
    %v237 = vld [vmem:[#allocation8 + $0x48] sm:$0xff]
    %v238 = vld [vmem:[#allocation8 + $0x50] sm:$0xf]
    %v239 = vld [vmem:[#allocation8 + $0x54] sm:$0xff]
    %v240 = vld [vmem:[#allocation8 + $0x5c] sm:$0xf]
    %v241 = vld [vmem:[#allocation8 + $0x60] sm:$0xff]
    %v242 = vld [vmem:[#allocation8 + $0x68] sm:$0xf]
    %v243 = vld [vmem:[#allocation8 + $0x6c] sm:$0xff]
    %v244 = vld [vmem:[#allocation8 + $0x74] sm:$0xf]
    %v245 = vld [vmem:[#allocation8 + $0x78] sm:$0xff]
    %v246 = vld [vmem:[#allocation8 + $0x80] sm:$0xf]
    %v247 = vld [vmem:[#allocation8 + $0x84] sm:$0xff]
    %v248 = vld [vmem:[#allocation8 + $0x8c] sm:$0xf]
    %v249 = vld [vmem:[#allocation8 + $0x90] sm:$0xff]
    %v250 = vld [vmem:[#allocation8 + $0x98] sm:$0xf]
    %v251 = vld [vmem:[#allocation8 + $0x9c] sm:$0xff]
    %v252 = vld [vmem:[#allocation8 + $0xa4] sm:$0xf]
    %v253 = vld [vmem:[#allocation8 + $0xa8] sm:$0xff]
    %v254 = vld [vmem:[#allocation8 + $0xb0] sm:$0xf]
    %v255 = vld [vmem:[#allocation8 + $0xb4] sm:$0xff]
    %v256 = vld [vmem:[#allocation8 + $0xbc] sm:$0xf]
    %v257 = vld [vmem:[#allocation8 + $0xc0] sm:$0xff]
    %v258 = vld [vmem:[#allocation8 + $0xc8] sm:$0xf]
    %v259 = vld [vmem:[#allocation8 + $0xcc] sm:$0xff]
    %v260 = vld [vmem:[#allocation8 + $0xd4] sm:$0xf]
    %v261 = vld [vmem:[#allocation8 + $0xd8] sm:$0xff]
    %v262 = vld [vmem:[#allocation8 + $0xe0] sm:$0xf]
    %v263 = vld [vmem:[#allocation8 + $0xe4] sm:$0xff]
    %v264 = vld [vmem:[#allocation8 + $0xec] sm:$0xf]
    %v265 = vld [vmem:[#allocation8 + $0xf0] sm:$0xff]
    %v266 = vld [vmem:[#allocation8 + $0xf8] sm:$0xf]
    %v267 = vld [vmem:[#allocation8 + $0xfc] sm:$0xff]
    %v268 = vld [vmem:[#allocation8 + $0x104] sm:$0xf]
    %v269 = vld [vmem:[#allocation8 + $0x108] sm:$0xff]
    %v270 = vld [vmem:[#allocation8 + $0x110] sm:$0xf]
    %v271 = vld [vmem:[#allocation8 + $0x114] sm:$0xff]
    %v272 = vld [vmem:[#allocation8 + $0x11c] sm:$0xf]
    %v273 = vld [vmem:[#allocation8 + $0x120] sm:$0xff]
    %v274 = vld [vmem:[#allocation8 + $0x128] sm:$0xf]
    %v275 = vld [vmem:[#allocation8 + $0x12c] sm:$0xff]
    %v276 = vld [vmem:[#allocation8 + $0x134] sm:$0xf]
    %v277 = vld [vmem:[#allocation8 + $0x138] sm:$0xff]
    %v278 = vld [vmem:[#allocation8 + $0x140] sm:$0xf]
    %v279 = vld [vmem:[#allocation8 + $0x144] sm:$0xff]
    %v280 = vld [vmem:[#allocation8 + $0x14c] sm:$0xf]
    %v281 = vld [vmem:[#allocation8 + $0x150] sm:$0xff]
    %v282 = vld [vmem:[#allocation8 + $0x158] sm:$0xf]
    %v283 = vld [vmem:[#allocation8 + $0x15c] sm:$0xff]
    %v284 = vld [vmem:[#allocation8 + $0x164] sm:$0xf]
    %v285 = vld [vmem:[#allocation8 + $0x168] sm:$0xff]
    %v286 = vld [vmem:[#allocation8 + $0x170] sm:$0xf]
    %v287 = vld [vmem:[#allocation8 + $0x174] sm:$0xff]
    %v288 = vld [vmem:[#allocation8 + $0x17c] sm:$0xf]
    %v289 = vld [vmem:[#allocation8 + $0x180] sm:$0xff]
    %v290 = vld [vmem:[#allocation8 + $0x188] sm:$0xf]
    %v291 = vld [vmem:[#allocation8 + $0x18c] sm:$0xff]
    %v292 = vld [vmem:[#allocation8 + $0x194] sm:$0xf]
    %v293 = vld [vmem:[#allocation8 + $0x198] sm:$0xff]
    %v294 = vld [vmem:[#allocation8 + $0x1a0] sm:$0xf]
    %v295 = vld [vmem:[#allocation8 + $0x1a4] sm:$0xff]
    %v296 = vld [vmem:[#allocation8 + $0x1ac] sm:$0xf]
    %v297 = vld [vmem:[#allocation8 + $0x1b0] sm:$0xff]
    %v298 = vld [vmem:[#allocation8 + $0x1b8] sm:$0xf]
    %v299 = vld [vmem:[#allocation8 + $0x1bc] sm:$0xff]
    %v300 = vld [vmem:[#allocation8 + $0x1c4] sm:$0xf]
    %v301 = vld [vmem:[#allocation8 + $0x1c8] sm:$0xff]
    %v302 = vld [vmem:[#allocation8 + $0x1d0] sm:$0xf]
    %v303 = vld [vmem:[#allocation8 + $0x1d4] sm:$0xff]
    %v304 = vld [vmem:[#allocation8 + $0x1dc] sm:$0xf]
    %v305 = vld [vmem:[#allocation8 + $0x1e0] sm:$0xff]
    %v306 = vld [vmem:[#allocation8 + $0x1e8] sm:$0xf]
    %v307 = vld [vmem:[#allocation8 + $0x1ec] sm:$0xff]
    %v308 = vld [vmem:[#allocation8 + $0x1f4] sm:$0xf]
    %v309 = vld [vmem:[#allocation8 + $0x1f8] sm:$0xff]
    %v310 = vld [vmem:[#allocation8 + $0x200] sm:$0xf]
    %v311 = vld [vmem:[#allocation8 + $0x204] sm:$0xff]
    %v312 = vld [vmem:[#allocation8 + $0x20c] sm:$0xf]
    %v313 = vld [vmem:[#allocation8 + $0x210] sm:$0xff]
    %v314 = vld [vmem:[#allocation8 + $0x218] sm:$0xf]
    %v315 = vld [vmem:[#allocation8 + $0x21c] sm:$0xff]
    %v316 = vld [vmem:[#allocation8 + $0x224] sm:$0xf]
    %v317 = vld [vmem:[#allocation8 + $0x228] sm:$0xff]
    %v318 = vld [vmem:[#allocation8 + $0x230] sm:$0xf]
    %v319 = vld [vmem:[#allocation8 + $0x234] sm:$0xff]
    %v320 = vld [vmem:[#allocation8 + $0x23c] sm:$0xf]
    %v321 = vld [vmem:[#allocation8 + $0x240] sm:$0xff]
    %v322 = vld [vmem:[#allocation8 + $0x248] sm:$0xf]
    %v323 = vld [vmem:[#allocation8 + $0x24c] sm:$0xff]
    %v324 = vld [vmem:[#allocation8 + $0x254] sm:$0xf]
    %v325 = vld [vmem:[#allocation8 + $0x258] sm:$0xff]
    %v326 = vld [vmem:[#allocation8 + $0x260] sm:$0xf]
    %v327 = vld [vmem:[#allocation8 + $0x264] sm:$0xff]
    %v328 = vld [vmem:[#allocation8 + $0x26c] sm:$0xf]
    %v329 = vld [vmem:[#allocation8 + $0x270] sm:$0xff]
    %v330 = vld [vmem:[#allocation8 + $0x278] sm:$0xf]
    %v331 = vld [vmem:[#allocation8 + $0x27c] sm:$0xff]
    %v332 = vld [vmem:[#allocation8 + $0x284] sm:$0xf]
    %v333 = vld [vmem:[#allocation8 + $0x288] sm:$0xff]
    %v334 = vld [vmem:[#allocation8 + $0x290] sm:$0xf]
    %v335 = vld [vmem:[#allocation8 + $0x294] sm:$0xff]
    %v336 = vld [vmem:[#allocation8 + $0x29c] sm:$0xf]
    %v337 = vld [vmem:[#allocation8 + $0x2a0] sm:$0xff]
    %v338 = vld [vmem:[#allocation8 + $0x2a8] sm:$0xf]
    %v339 = vld [vmem:[#allocation8 + $0x2ac] sm:$0xff]
    %v340 = vld [vmem:[#allocation8 + $0x2b4] sm:$0xf]
    %v341 = vld [vmem:[#allocation8 + $0x2b8] sm:$0xff]
    %v342 = vld [vmem:[#allocation8 + $0x2c0] sm:$0xf]
    %v343 = vld [vmem:[#allocation8 + $0x2c4] sm:$0xff]
    %v344 = vld [vmem:[#allocation8 + $0x2cc] sm:$0xf]
    %v345 = vld [vmem:[#allocation8 + $0x2d0] sm:$0xff]
    %v346 = vld [vmem:[#allocation8 + $0x2d8] sm:$0xf]
    %v347 = vld [vmem:[#allocation8 + $0x2dc] sm:$0xff]
    %v348 = vld [vmem:[#allocation8 + $0x2e4] sm:$0xf]
    %v349 = vld [vmem:[#allocation8 + $0x2e8] sm:$0xff]
    %v350 = vld [vmem:[#allocation8 + $0x2f0] sm:$0xf]
    %v351 = vld [vmem:[#allocation8 + $0x2f4] sm:$0xff]
    %v352 = vld [vmem:[#allocation8 + $0x2fc] sm:$0xf]
    %v353 = vld [vmem:[%s4] sm:$0x7]
    %v355 = vlaneseq
    %v356 = vshrl.u32 %v355, 7
    %v357 = vsub.s32 0, %v356
    %v358 = vrot.slane %v353, %v357
    %v359 = vlaneseq
    %v360 = vshrl.u32 %v359, 7
    %v361 = vsub.s32 1, %v360
    %v362 = vrot.slane %v353, %v361
    %v363 = vlaneseq
    %v364 = vshrl.u32 %v363, 7
    %v365 = vsub.s32 2, %v364
    %v366 = vrot.slane %v353, %v365
    %v498 = vunpack.c.l.b16 %v225
    %v499 = vunpack.c.h.b16 %v225
    %v500 = vunpack.c.l.b16 %v226
    %v501 = vunpack.c.l.b16 %v227
    %v502 = vunpack.c.h.b16 %v227
    %v503 = vunpack.c.l.b16 %v228
    %v504 = vunpack.c.l.b16 %v229
    %v505 = vunpack.c.h.b16 %v229
    %v506 = vunpack.c.l.b16 %v230
    %v507 = vunpack.c.l.b16 %v231
    %v508 = vunpack.c.h.b16 %v231
    %v509 = vunpack.c.l.b16 %v232
    %v510 = vunpack.c.l.b16 %v233
    %v511 = vunpack.c.h.b16 %v233
    %v512 = vunpack.c.l.b16 %v234
    %v513 = vunpack.c.l.b16 %v235
    %v514 = vunpack.c.h.b16 %v235
    %v515 = vunpack.c.l.b16 %v236
    %v516 = vunpack.c.l.b16 %v237
    %v517 = vunpack.c.h.b16 %v237
    %v518 = vunpack.c.l.b16 %v238
    %v519 = vunpack.c.l.b16 %v239
    %v520 = vunpack.c.h.b16 %v239
    %v521 = vunpack.c.l.b16 %v240
    %v522 = vunpack.c.l.b16 %v241
    %v523 = vunpack.c.h.b16 %v241
    %v524 = vunpack.c.l.b16 %v242
    %v525 = vunpack.c.l.b16 %v243
    %v526 = vunpack.c.h.b16 %v243
    %v527 = vunpack.c.l.b16 %v244
    %v528 = vunpack.c.l.b16 %v245
    %v529 = vunpack.c.h.b16 %v245
    %v530 = vunpack.c.l.b16 %v246
    %v531 = vunpack.c.l.b16 %v247
    %v532 = vunpack.c.h.b16 %v247
    %v533 = vunpack.c.l.b16 %v248
    %v534 = vunpack.c.l.b16 %v249
    %v535 = vunpack.c.h.b16 %v249
    %v536 = vunpack.c.l.b16 %v250
    %v537 = vunpack.c.l.b16 %v251
    %v538 = vunpack.c.h.b16 %v251
    %v539 = vunpack.c.l.b16 %v252
    %v540 = vunpack.c.l.b16 %v253
    %v541 = vunpack.c.h.b16 %v253
    %v542 = vunpack.c.l.b16 %v254
    %v543 = vunpack.c.l.b16 %v255
    %v544 = vunpack.c.h.b16 %v255
    %v545 = vunpack.c.l.b16 %v256
    %v546 = vunpack.c.l.b16 %v257
    %v547 = vunpack.c.h.b16 %v257
    %v548 = vunpack.c.l.b16 %v258
    %v549 = vunpack.c.l.b16 %v259
    %v550 = vunpack.c.h.b16 %v259
    %v551 = vunpack.c.l.b16 %v260
    %v552 = vunpack.c.l.b16 %v261
    %v553 = vunpack.c.h.b16 %v261
    %v554 = vunpack.c.l.b16 %v262
    %v555 = vunpack.c.l.b16 %v263
    %v556 = vunpack.c.h.b16 %v263
    %v557 = vunpack.c.l.b16 %v264
    %v558 = vunpack.c.l.b16 %v265
    %v559 = vunpack.c.h.b16 %v265
    %v560 = vunpack.c.l.b16 %v266
    %v561 = vunpack.c.l.b16 %v267
    %v562 = vunpack.c.h.b16 %v267
    %v563 = vunpack.c.l.b16 %v268
    %v564 = vunpack.c.l.b16 %v269
    %v565 = vunpack.c.h.b16 %v269
    %v566 = vunpack.c.l.b16 %v270
    %v567 = vunpack.c.l.b16 %v271
    %v568 = vunpack.c.h.b16 %v271
    %v569 = vunpack.c.l.b16 %v272
    %v570 = vunpack.c.l.b16 %v273
    %v571 = vunpack.c.h.b16 %v273
    %v572 = vunpack.c.l.b16 %v274
    %v573 = vunpack.c.l.b16 %v275
    %v574 = vunpack.c.h.b16 %v275
    %v575 = vunpack.c.l.b16 %v276
    %v576 = vunpack.c.l.b16 %v277
    %v577 = vunpack.c.h.b16 %v277
    %v578 = vunpack.c.l.b16 %v278
    %v579 = vunpack.c.l.b16 %v279
    %v580 = vunpack.c.h.b16 %v279
    %v581 = vunpack.c.l.b16 %v280
    %v582 = vunpack.c.l.b16 %v281
    %v583 = vunpack.c.h.b16 %v281
    %v584 = vunpack.c.l.b16 %v282
    %v585 = vunpack.c.l.b16 %v283
    %v586 = vunpack.c.h.b16 %v283
    %v587 = vunpack.c.l.b16 %v284
    %v588 = vunpack.c.l.b16 %v285
    %v589 = vunpack.c.h.b16 %v285
    %v590 = vunpack.c.l.b16 %v286
    %v591 = vunpack.c.l.b16 %v287
    %v592 = vunpack.c.h.b16 %v287
    %v593 = vunpack.c.l.b16 %v288
    %v594 = vunpack.c.l.b16 %v289
    %v595 = vunpack.c.h.b16 %v289
    %v596 = vunpack.c.l.b16 %v290
    %v597 = vunpack.c.l.b16 %v291
    %v598 = vunpack.c.h.b16 %v291
    %v599 = vunpack.c.l.b16 %v292
    %v600 = vunpack.c.l.b16 %v293
    %v601 = vunpack.c.h.b16 %v293
    %v602 = vunpack.c.l.b16 %v294
    %v603 = vunpack.c.l.b16 %v295
    %v604 = vunpack.c.h.b16 %v295
    %v605 = vunpack.c.l.b16 %v296
    %v606 = vunpack.c.l.b16 %v297
    %v607 = vunpack.c.h.b16 %v297
    %v608 = vunpack.c.l.b16 %v298
    %v609 = vunpack.c.l.b16 %v299
    %v610 = vunpack.c.h.b16 %v299
    %v611 = vunpack.c.l.b16 %v300
    %v612 = vunpack.c.l.b16 %v301
    %v613 = vunpack.c.h.b16 %v301
    %v614 = vunpack.c.l.b16 %v302
    %v615 = vunpack.c.l.b16 %v303
    %v616 = vunpack.c.h.b16 %v303
    %v617 = vunpack.c.l.b16 %v304
    %v618 = vunpack.c.l.b16 %v305
    %v619 = vunpack.c.h.b16 %v305
    %v620 = vunpack.c.l.b16 %v306
    %v621 = vunpack.c.l.b16 %v307
    %v622 = vunpack.c.h.b16 %v307
    %v623 = vunpack.c.l.b16 %v308
    %v624 = vunpack.c.l.b16 %v309
    %v625 = vunpack.c.h.b16 %v309
    %v626 = vunpack.c.l.b16 %v310
    %v627 = vunpack.c.l.b16 %v311
    %v628 = vunpack.c.h.b16 %v311
    %v629 = vunpack.c.l.b16 %v312
    %v630 = vunpack.c.l.b16 %v313
    %v631 = vunpack.c.h.b16 %v313
    %v632 = vunpack.c.l.b16 %v314
    %v633 = vunpack.c.l.b16 %v315
    %v634 = vunpack.c.h.b16 %v315
    %v635 = vunpack.c.l.b16 %v316
    %v636 = vunpack.c.l.b16 %v317
    %v637 = vunpack.c.h.b16 %v317
    %v638 = vunpack.c.l.b16 %v318
    %v639 = vunpack.c.l.b16 %v319
    %v640 = vunpack.c.h.b16 %v319
    %v641 = vunpack.c.l.b16 %v320
    %v642 = vunpack.c.l.b16 %v321
    %v643 = vunpack.c.h.b16 %v321
    %v644 = vunpack.c.l.b16 %v322
    %v645 = vunpack.c.l.b16 %v323
    %v646 = vunpack.c.h.b16 %v323
    %v647 = vunpack.c.l.b16 %v324
    %v648 = vunpack.c.l.b16 %v325
    %v649 = vunpack.c.h.b16 %v325
    %v650 = vunpack.c.l.b16 %v326
    %v651 = vunpack.c.l.b16 %v327
    %v652 = vunpack.c.h.b16 %v327
    %v653 = vunpack.c.l.b16 %v328
    %v654 = vunpack.c.l.b16 %v329
    %v655 = vunpack.c.h.b16 %v329
    %v656 = vunpack.c.l.b16 %v330
    %v657 = vunpack.c.l.b16 %v331
    %v658 = vunpack.c.h.b16 %v331
    %v659 = vunpack.c.l.b16 %v332
    %v660 = vunpack.c.l.b16 %v333
    %v661 = vunpack.c.h.b16 %v333
    %v662 = vunpack.c.l.b16 %v334
    %v663 = vunpack.c.l.b16 %v335
    %v664 = vunpack.c.h.b16 %v335
    %v665 = vunpack.c.l.b16 %v336
    %v666 = vunpack.c.l.b16 %v337
    %v667 = vunpack.c.h.b16 %v337
    %v668 = vunpack.c.l.b16 %v338
    %v669 = vunpack.c.l.b16 %v339
    %v670 = vunpack.c.h.b16 %v339
    %v671 = vunpack.c.l.b16 %v340
    %v672 = vunpack.c.l.b16 %v341
    %v673 = vunpack.c.h.b16 %v341
    %v674 = vunpack.c.l.b16 %v342
    %v675 = vunpack.c.l.b16 %v343
    %v676 = vunpack.c.h.b16 %v343
    %v677 = vunpack.c.l.b16 %v344
    %v678 = vunpack.c.l.b16 %v345
    %v679 = vunpack.c.h.b16 %v345
    %v680 = vunpack.c.l.b16 %v346
    %v681 = vunpack.c.l.b16 %v347
    %v682 = vunpack.c.h.b16 %v347
    %v683 = vunpack.c.l.b16 %v348
    %v684 = vunpack.c.l.b16 %v349
    %v685 = vunpack.c.h.b16 %v349
    %v686 = vunpack.c.l.b16 %v350
    %v687 = vunpack.c.l.b16 %v351
    %v688 = vunpack.c.h.b16 %v351
    %v689 = vunpack.c.l.b16 %v352
    %v690 = vpack.c.b16 %v501, %v498
    %v691 = vpack.c.b16 %v502, %v499
    %v692 = vpack.c.b16 %v503, %v500
    %v693 = vpack.c.b16 %v507, %v504
    %v694 = vpack.c.b16 %v508, %v505
    %v695 = vpack.c.b16 %v509, %v506
    %v696 = vpack.c.b16 %v513, %v510
    %v697 = vpack.c.b16 %v514, %v511
    %v698 = vpack.c.b16 %v515, %v512
    %v699 = vpack.c.b16 %v519, %v516
    %v700 = vpack.c.b16 %v520, %v517
    %v701 = vpack.c.b16 %v521, %v518
    %v702 = vpack.c.b16 %v525, %v522
    %v703 = vpack.c.b16 %v526, %v523
    %v704 = vpack.c.b16 %v527, %v524
    %v705 = vpack.c.b16 %v531, %v528
    %v706 = vpack.c.b16 %v532, %v529
    %v707 = vpack.c.b16 %v533, %v530
    %v708 = vpack.c.b16 %v537, %v534
    %v709 = vpack.c.b16 %v538, %v535
    %v710 = vpack.c.b16 %v539, %v536
    %v711 = vpack.c.b16 %v543, %v540
    %v712 = vpack.c.b16 %v544, %v541
    %v713 = vpack.c.b16 %v545, %v542
    %v714 = vpack.c.b16 %v549, %v546
    %v715 = vpack.c.b16 %v550, %v547
    %v716 = vpack.c.b16 %v551, %v548
    %v717 = vpack.c.b16 %v555, %v552
    %v718 = vpack.c.b16 %v556, %v553
    %v719 = vpack.c.b16 %v557, %v554
    %v720 = vpack.c.b16 %v561, %v558
    %v721 = vpack.c.b16 %v562, %v559
    %v722 = vpack.c.b16 %v563, %v560
    %v723 = vpack.c.b16 %v567, %v564
    %v724 = vpack.c.b16 %v568, %v565
    %v725 = vpack.c.b16 %v569, %v566
    %v726 = vpack.c.b16 %v573, %v570
    %v727 = vpack.c.b16 %v574, %v571
    %v728 = vpack.c.b16 %v575, %v572
    %v729 = vpack.c.b16 %v579, %v576
    %v730 = vpack.c.b16 %v580, %v577
    %v731 = vpack.c.b16 %v581, %v578
    %v732 = vpack.c.b16 %v585, %v582
    %v733 = vpack.c.b16 %v586, %v583
    %v734 = vpack.c.b16 %v587, %v584
    %v735 = vpack.c.b16 %v591, %v588
    %v736 = vpack.c.b16 %v592, %v589
    %v737 = vpack.c.b16 %v593, %v590
    %v738 = vpack.c.b16 %v597, %v594
    %v739 = vpack.c.b16 %v598, %v595
    %v740 = vpack.c.b16 %v599, %v596
    %v741 = vpack.c.b16 %v603, %v600
    %v742 = vpack.c.b16 %v604, %v601
    %v743 = vpack.c.b16 %v605, %v602
    %v744 = vpack.c.b16 %v609, %v606
    %v745 = vpack.c.b16 %v610, %v607
    %v746 = vpack.c.b16 %v611, %v608
    %v747 = vpack.c.b16 %v615, %v612
    %v748 = vpack.c.b16 %v616, %v613
    %v749 = vpack.c.b16 %v617, %v614
    %v750 = vpack.c.b16 %v621, %v618
    %v751 = vpack.c.b16 %v622, %v619
    %v752 = vpack.c.b16 %v623, %v620
    %v753 = vpack.c.b16 %v627, %v624
    %v754 = vpack.c.b16 %v628, %v625
    %v755 = vpack.c.b16 %v629, %v626
    %v756 = vpack.c.b16 %v633, %v630
    %v757 = vpack.c.b16 %v634, %v631
    %v758 = vpack.c.b16 %v635, %v632
    %v759 = vpack.c.b16 %v639, %v636
    %v760 = vpack.c.b16 %v640, %v637
    %v761 = vpack.c.b16 %v641, %v638
    %v762 = vpack.c.b16 %v645, %v642
    %v763 = vpack.c.b16 %v646, %v643
    %v764 = vpack.c.b16 %v647, %v644
    %v765 = vpack.c.b16 %v651, %v648
    %v766 = vpack.c.b16 %v652, %v649
    %v767 = vpack.c.b16 %v653, %v650
    %v768 = vpack.c.b16 %v657, %v654
    %v769 = vpack.c.b16 %v658, %v655
    %v770 = vpack.c.b16 %v659, %v656
    %v771 = vpack.c.b16 %v663, %v660
    %v772 = vpack.c.b16 %v664, %v661
    %v773 = vpack.c.b16 %v665, %v662
    %v774 = vpack.c.b16 %v669, %v666
    %v775 = vpack.c.b16 %v670, %v667
    %v776 = vpack.c.b16 %v671, %v668
    %v777 = vpack.c.b16 %v675, %v672
    %v778 = vpack.c.b16 %v676, %v673
    %v779 = vpack.c.b16 %v677, %v674
    %v780 = vpack.c.b16 %v681, %v678
    %v781 = vpack.c.b16 %v682, %v679
    %v782 = vpack.c.b16 %v683, %v680
    %v783 = vpack.c.b16 %v687, %v684
    %v784 = vpack.c.b16 %v688, %v685
    %v785 = vpack.c.b16 %v689, %v686
    %882 = vmatprep.subr.bf16.mxu0 %v691
    %883 = vmatpush1.bf16.msra.mxu0 %v690
    %884 = vmatprep.subr.bf16.mxu0 %v694
    %885 = vmatpush1.bf16.msra.mxu0 %v693
    %886 = vmatprep.subr.bf16.mxu0 %v697
    %887 = vmatpush1.bf16.msra.mxu0 %v696
    %888 = vmatprep.subr.bf16.mxu0 %v700
    %889 = vmatpush1.bf16.msra.mxu0 %v699
    %890 = vmatprep.subr.bf16.mxu0 %v703
    %891 = vmatpush1.bf16.msra.mxu0 %v702
    %892 = vmatprep.subr.bf16.mxu0 %v706
    %893 = vmatpush1.bf16.msra.mxu0 %v705
    %894 = vmatprep.subr.bf16.mxu0 %v709
    %895 = vmatpush1.bf16.msra.mxu0 %v708
    %896 = vmatprep.subr.bf16.mxu0 %v712
    %897 = vmatpush1.bf16.msra.mxu0 %v711
    %898 = vmatprep.subr.bf16.mxu0 %v715
    %899 = vmatpush1.bf16.msra.mxu0 %v714
    %900 = vmatprep.subr.bf16.mxu0 %v718
    %901 = vmatpush1.bf16.msra.mxu0 %v717
    %902 = vmatprep.subr.bf16.mxu0 %v721
    %903 = vmatpush1.bf16.msra.mxu0 %v720
    %904 = vmatprep.subr.bf16.mxu0 %v724
    %905 = vmatpush1.bf16.msra.mxu0 %v723
    %906 = vmatprep.subr.bf16.mxu0 %v727
    %907 = vmatpush1.bf16.msra.mxu0 %v726
    %908 = vmatprep.subr.bf16.mxu0 %v730
    %909 = vmatpush1.bf16.msra.mxu0 %v729
    %910 = vmatprep.subr.bf16.mxu0 %v733
    %911 = vmatpush1.bf16.msra.mxu0 %v732
    %912 = vmatprep.subr.bf16.mxu0 %v736
    %913 = vmatpush1.bf16.msra.mxu0 %v735
    %914 = vmatprep.mubr.bf16.mxu0 %v222
    %915 = vmatmul.mubr.bf16.gmra.mrb[0].mxu0 %v221
    %v916 = vpop.f32.mrb[0].mxu0
    %v917 = vadd.f32 %v358, %v916
    %v918 = vpop.f32.mrb[0].mxu0
    %v919 = vadd.f32 %v362, %v918
    %v920 = vpop.f32.mrb[0].mxu0
    %v921 = vpop.f32.mrb[0].mxu0
    %922 = vdwg.mxu0
    %923 = vmatprep.subr.bf16.mxu0 %v739
    %924 = vmatpush1.bf16.msra.mxu0 %v738
    %925 = vmatprep.subr.bf16.mxu0 %v742
    %926 = vmatpush1.bf16.msra.mxu0 %v741
    %927 = vmatprep.subr.bf16.mxu0 %v745
    %928 = vmatpush1.bf16.msra.mxu0 %v744
    %929 = vmatprep.subr.bf16.mxu0 %v748
    %930 = vmatpush1.bf16.msra.mxu0 %v747
    %931 = vmatprep.subr.bf16.mxu0 %v751
    %932 = vmatpush1.bf16.msra.mxu0 %v750
    %933 = vmatprep.subr.bf16.mxu0 %v754
    %934 = vmatpush1.bf16.msra.mxu0 %v753
    %935 = vmatprep.subr.bf16.mxu0 %v757
    %936 = vmatpush1.bf16.msra.mxu0 %v756
    %937 = vmatprep.subr.bf16.mxu0 %v760
    %938 = vmatpush1.bf16.msra.mxu0 %v759
    %939 = vmatprep.subr.bf16.mxu0 %v763
    %940 = vmatpush1.bf16.msra.mxu0 %v762
    %941 = vmatprep.subr.bf16.mxu0 %v766
    %942 = vmatpush1.bf16.msra.mxu0 %v765
    %943 = vmatprep.subr.bf16.mxu0 %v769
    %944 = vmatpush1.bf16.msra.mxu0 %v768
    %945 = vmatprep.subr.bf16.mxu0 %v772
    %946 = vmatpush1.bf16.msra.mxu0 %v771
    %947 = vmatprep.subr.bf16.mxu0 %v775
    %948 = vmatpush1.bf16.msra.mxu0 %v774
    %949 = vmatprep.subr.bf16.mxu0 %v778
    %950 = vmatpush1.bf16.msra.mxu0 %v777
    %951 = vmatprep.subr.bf16.mxu0 %v781
    %952 = vmatpush1.bf16.msra.mxu0 %v780
    %953 = vmatprep.subr.bf16.mxu0 %v784
    %954 = vmatpush1.bf16.msra.mxu0 %v783
    %955 = vmatprep.mubr.bf16.mxu0 %v224
    %956 = vmatmul.mubr.bf16.gmra.mrb[0].mxu0 %v223
    %v957 = vpop.f32.mrb[0].mxu0
    %v958 = vadd.f32 %v917, %v957
    %v959 = vpop.f32.mrb[0].mxu0
    %v960 = vadd.f32 %v919, %v959
    %v961 = vpop.f32.mrb[0].mxu0
    %v962 = vpop.f32.mrb[0].mxu0
    %963 = vdwg.mxu0
    %964 = vmatprep.subr.bf16.mxu0 0
    %965 = vmatpush1.bf16.msra.mxu0 %v692
    %966 = vmatprep.subr.bf16.mxu0 0
    %967 = vmatpush1.bf16.msra.mxu0 %v695
    %968 = vmatprep.subr.bf16.mxu0 0
    %969 = vmatpush1.bf16.msra.mxu0 %v698
    %970 = vmatprep.subr.bf16.mxu0 0
    %971 = vmatpush1.bf16.msra.mxu0 %v701
    %972 = vmatprep.subr.bf16.mxu0 0
    %973 = vmatpush1.bf16.msra.mxu0 %v704
    %974 = vmatprep.subr.bf16.mxu0 0
    %975 = vmatpush1.bf16.msra.mxu0 %v707
    %976 = vmatprep.subr.bf16.mxu0 0
    %977 = vmatpush1.bf16.msra.mxu0 %v710
    %978 = vmatprep.subr.bf16.mxu0 0
    %979 = vmatpush1.bf16.msra.mxu0 %v713
    %980 = vmatprep.subr.bf16.mxu0 0
    %981 = vmatpush1.bf16.msra.mxu0 %v716
    %982 = vmatprep.subr.bf16.mxu0 0
    %983 = vmatpush1.bf16.msra.mxu0 %v719
    %984 = vmatprep.subr.bf16.mxu0 0
    %985 = vmatpush1.bf16.msra.mxu0 %v722
    %986 = vmatprep.subr.bf16.mxu0 0
    %987 = vmatpush1.bf16.msra.mxu0 %v725
    %988 = vmatprep.subr.bf16.mxu0 0
    %989 = vmatpush1.bf16.msra.mxu0 %v728
    %990 = vmatprep.subr.bf16.mxu0 0
    %991 = vmatpush1.bf16.msra.mxu0 %v731
    %992 = vmatprep.subr.bf16.mxu0 0
    %993 = vmatpush1.bf16.msra.mxu0 %v734
    %994 = vmatprep.subr.bf16.mxu0 0
    %995 = vmatpush1.bf16.msra.mxu0 %v737
    %996 = vmatprep.mubr.bf16.mxu0 %v222
    %997 = vmatmul.mubr.bf16.gmra.mrb[0].mxu0 %v221
    %v998 = vpop.f32.mrb[0].mxu0
    %v999 = vadd.f32 %v366, %v998
    %v1000 = vpop.f32.mrb[0].mxu0
    %v1001 = vpop.f32.mrb[0].mxu0
    %v1002 = vpop.f32.mrb[0].mxu0
    %1003 = vdwg.mxu0
    %1004 = vmatprep.subr.bf16.mxu0 0
    %1005 = vmatpush1.bf16.msra.mxu0 %v740
    %1006 = vmatprep.subr.bf16.mxu0 0
    %1007 = vmatpush1.bf16.msra.mxu0 %v743
    %1008 = vmatprep.subr.bf16.mxu0 0
    %1009 = vmatpush1.bf16.msra.mxu0 %v746
    %1010 = vmatprep.subr.bf16.mxu0 0
    %1011 = vmatpush1.bf16.msra.mxu0 %v749
    %1012 = vmatprep.subr.bf16.mxu0 0
    %1013 = vmatpush1.bf16.msra.mxu0 %v752
    %1014 = vmatprep.subr.bf16.mxu0 0
    %1015 = vmatpush1.bf16.msra.mxu0 %v755
    %1016 = vmatprep.subr.bf16.mxu0 0
    %1017 = vmatpush1.bf16.msra.mxu0 %v758
    %1018 = vmatprep.subr.bf16.mxu0 0
    %1019 = vmatpush1.bf16.msra.mxu0 %v761
    %1020 = vmatprep.subr.bf16.mxu0 0
    %1021 = vmatpush1.bf16.msra.mxu0 %v764
    %1022 = vmatprep.subr.bf16.mxu0 0
    %1023 = vmatpush1.bf16.msra.mxu0 %v767
    %1024 = vmatprep.subr.bf16.mxu0 0
    %1025 = vmatpush1.bf16.msra.mxu0 %v770
    %1026 = vmatprep.subr.bf16.mxu0 0
    %1027 = vmatpush1.bf16.msra.mxu0 %v773
    %1028 = vmatprep.subr.bf16.mxu0 0
    %1029 = vmatpush1.bf16.msra.mxu0 %v776
    %1030 = vmatprep.subr.bf16.mxu0 0
    %1031 = vmatpush1.bf16.msra.mxu0 %v779
    %1032 = vmatprep.subr.bf16.mxu0 0
    %1033 = vmatpush1.bf16.msra.mxu0 %v782
    %1034 = vmatprep.subr.bf16.mxu0 0
    %1035 = vmatpush1.bf16.msra.mxu0 %v785
    %1036 = vmatprep.mubr.bf16.mxu0 %v224
    %1037 = vmatmul.mubr.bf16.gmra.mrb[0].mxu0 %v223
    %v1038 = vpop.f32.mrb[0].mxu0
    %v1039 = vadd.f32 %v999, %v1038
    %v1040 = vpop.f32.mrb[0].mxu0
    %v1041 = vpop.f32.mrb[0].mxu0
    %v1042 = vpop.f32.mrb[0].mxu0
    %1043 = vdwg.mxu0
    %v1044 = vmax.f32 %v958, 0.0
    %v1045 = vmax.f32 %v960, 0.0
    %v1046 = vmax.f32 %v1039, 0.0
    %v1047 = vpack.c.bf16 %v1044, %v1044
    %v1048 = vpack.c.bf16 %v1045, %v1045
    %v1049 = vpack.c.bf16 %v1046, %v1046
    %v1050 = vld [vmem:[#allocation9] sm:$0xf]
    %v1051 = vld [vmem:[#allocation9 + $0x4] sm:$0xf]
    %v1052 = vld [vmem:[#allocation9 + $0x8] sm:$0xf]
    %v1053 = vld [vmem:[#allocation9 + $0xc] sm:$0xf]
    %v1054 = vld [vmem:[#allocation9 + $0x10] sm:$0xf]
    %v1055 = vld [vmem:[#allocation9 + $0x14] sm:$0xf]
    %v1056 = vld [vmem:[#allocation9 + $0x18] sm:$0xf]
    %v1057 = vld [vmem:[#allocation9 + $0x1c] sm:$0xf]
    %v1058 = vld [vmem:[#allocation9 + $0x20] sm:$0xf]
    %v1059 = vld [vmem:[#allocation9 + $0x24] sm:$0xf]
    %v1060 = vld [vmem:[#allocation9 + $0x28] sm:$0xf]
    %v1061 = vld [vmem:[#allocation9 + $0x2c] sm:$0xf]
    %v1062 = vld [vmem:[#allocation9 + $0x30] sm:$0xf]
    %v1063 = vld [vmem:[#allocation9 + $0x34] sm:$0xf]
    %v1064 = vld [vmem:[#allocation9 + $0x38] sm:$0xf]
    %v1065 = vld [vmem:[#allocation9 + $0x3c] sm:$0xf]
    %v1066 = vld [vmem:[#allocation9 + $0x40] sm:$0xf]
    %v1067 = vld [vmem:[#allocation9 + $0x44] sm:$0xf]
    %v1068 = vld [vmem:[#allocation9 + $0x48] sm:$0xf]
    %v1069 = vld [vmem:[#allocation9 + $0x4c] sm:$0xf]
    %v1070 = vld [vmem:[#allocation9 + $0x50] sm:$0xf]
    %v1071 = vld [vmem:[#allocation9 + $0x54] sm:$0xf]
    %v1072 = vld [vmem:[#allocation9 + $0x58] sm:$0xf]
    %v1073 = vld [vmem:[#allocation9 + $0x5c] sm:$0xf]
    %v1074 = vld [vmem:[#allocation9 + $0x60] sm:$0xf]
    %v1075 = vld [vmem:[#allocation9 + $0x64] sm:$0xf]
    %v1076 = vld [vmem:[#allocation9 + $0x68] sm:$0xf]
    %v1077 = vld [vmem:[#allocation9 + $0x6c] sm:$0xf]
    %v1078 = vld [vmem:[#allocation9 + $0x70] sm:$0xf]
    %v1079 = vld [vmem:[#allocation9 + $0x74] sm:$0xf]
    %v1080 = vld [vmem:[#allocation9 + $0x78] sm:$0xf]
    %v1081 = vld [vmem:[#allocation9 + $0x7c] sm:$0xf]
    %v1082 = vld [vmem:[#allocation9 + $0x80] sm:$0xf]
    %v1083 = vld [vmem:[#allocation9 + $0x84] sm:$0xf]
    %v1084 = vld [vmem:[#allocation9 + $0x88] sm:$0xf]
    %v1085 = vld [vmem:[#allocation9 + $0x8c] sm:$0xf]
    %v1086 = vld [vmem:[#allocation9 + $0x90] sm:$0xf]
    %v1087 = vld [vmem:[#allocation9 + $0x94] sm:$0xf]
    %v1088 = vld [vmem:[#allocation9 + $0x98] sm:$0xf]
    %v1089 = vld [vmem:[#allocation9 + $0x9c] sm:$0xf]
    %v1090 = vld [vmem:[#allocation9 + $0xa0] sm:$0xf]
    %v1091 = vld [vmem:[#allocation9 + $0xa4] sm:$0xf]
    %v1092 = vld [vmem:[#allocation9 + $0xa8] sm:$0xf]
    %v1093 = vld [vmem:[#allocation9 + $0xac] sm:$0xf]
    %v1094 = vld [vmem:[#allocation9 + $0xb0] sm:$0xf]
    %v1095 = vld [vmem:[#allocation9 + $0xb4] sm:$0xf]
    %v1096 = vld [vmem:[#allocation9 + $0xb8] sm:$0xf]
    %v1097 = vld [vmem:[#allocation9 + $0xbc] sm:$0xf]
    %v1098 = vld [vmem:[#allocation2] sm:$0x1]
    %v1100 = vlaneseq
    %v1101 = vshrl.u32 %v1100, 7
    %v1102 = vsub.s32 0, %v1101
    %v1103 = vrot.slane %v1098, %v1102
    %1104 = vset.pattern.permute.xlu0 0
    %1105 = vperm.xlu0 %1104, %v1103
    %v1106 = vpop.permute.xlu0 %1105
    %v1156 = vunpack.c.l.b16 %v1050
    %v1157 = vunpack.c.l.b16 %v1051
    %v1158 = vunpack.c.l.b16 %v1052
    %v1159 = vunpack.c.l.b16 %v1053
    %v1160 = vunpack.c.l.b16 %v1054
    %v1161 = vunpack.c.l.b16 %v1055
    %v1162 = vunpack.c.l.b16 %v1056
    %v1163 = vunpack.c.l.b16 %v1057
    %v1164 = vunpack.c.l.b16 %v1058
    %v1165 = vunpack.c.l.b16 %v1059
    %v1166 = vunpack.c.l.b16 %v1060
    %v1167 = vunpack.c.l.b16 %v1061
    %v1168 = vunpack.c.l.b16 %v1062
    %v1169 = vunpack.c.l.b16 %v1063
    %v1170 = vunpack.c.l.b16 %v1064
    %v1171 = vunpack.c.l.b16 %v1065
    %v1172 = vunpack.c.l.b16 %v1066
    %v1173 = vunpack.c.l.b16 %v1067
    %v1174 = vunpack.c.l.b16 %v1068
    %v1175 = vunpack.c.l.b16 %v1069
    %v1176 = vunpack.c.l.b16 %v1070
    %v1177 = vunpack.c.l.b16 %v1071
    %v1178 = vunpack.c.l.b16 %v1072
    %v1179 = vunpack.c.l.b16 %v1073
    %v1180 = vunpack.c.l.b16 %v1074
    %v1181 = vunpack.c.l.b16 %v1075
    %v1182 = vunpack.c.l.b16 %v1076
    %v1183 = vunpack.c.l.b16 %v1077
    %v1184 = vunpack.c.l.b16 %v1078
    %v1185 = vunpack.c.l.b16 %v1079
    %v1186 = vunpack.c.l.b16 %v1080
    %v1187 = vunpack.c.l.b16 %v1081
    %v1188 = vunpack.c.l.b16 %v1082
    %v1189 = vunpack.c.l.b16 %v1083
    %v1190 = vunpack.c.l.b16 %v1084
    %v1191 = vunpack.c.l.b16 %v1085
    %v1192 = vunpack.c.l.b16 %v1086
    %v1193 = vunpack.c.l.b16 %v1087
    %v1194 = vunpack.c.l.b16 %v1088
    %v1195 = vunpack.c.l.b16 %v1089
    %v1196 = vunpack.c.l.b16 %v1090
    %v1197 = vunpack.c.l.b16 %v1091
    %v1198 = vunpack.c.l.b16 %v1092
    %v1199 = vunpack.c.l.b16 %v1093
    %v1200 = vunpack.c.l.b16 %v1094
    %v1201 = vunpack.c.l.b16 %v1095
    %v1202 = vunpack.c.l.b16 %v1096
    %v1203 = vunpack.c.l.b16 %v1097
    %v1204 = vpack.c.b16 %v1157, %v1156
    %v1205 = vpack.c.b16 %v1159, %v1158
    %v1206 = vpack.c.b16 %v1161, %v1160
    %v1207 = vpack.c.b16 %v1163, %v1162
    %v1208 = vpack.c.b16 %v1165, %v1164
    %v1209 = vpack.c.b16 %v1167, %v1166
    %v1210 = vpack.c.b16 %v1169, %v1168
    %v1211 = vpack.c.b16 %v1171, %v1170
    %v1212 = vpack.c.b16 %v1173, %v1172
    %v1213 = vpack.c.b16 %v1175, %v1174
    %v1214 = vpack.c.b16 %v1177, %v1176
    %v1215 = vpack.c.b16 %v1179, %v1178
    %v1216 = vpack.c.b16 %v1181, %v1180
    %v1217 = vpack.c.b16 %v1183, %v1182
    %v1218 = vpack.c.b16 %v1185, %v1184
    %v1219 = vpack.c.b16 %v1187, %v1186
    %v1220 = vpack.c.b16 %v1189, %v1188
    %v1221 = vpack.c.b16 %v1191, %v1190
    %v1222 = vpack.c.b16 %v1193, %v1192
    %v1223 = vpack.c.b16 %v1195, %v1194
    %v1224 = vpack.c.b16 %v1197, %v1196
    %v1225 = vpack.c.b16 %v1199, %v1198
    %v1226 = vpack.c.b16 %v1201, %v1200
    %v1227 = vpack.c.b16 %v1203, %v1202
    %1252 = vmatprep.subr.bf16.mxu0 0
    %1253 = vmatpush1.bf16.msra.mxu0 %v1204
    %1254 = vmatprep.subr.bf16.mxu0 0
    %1255 = vmatpush1.bf16.msra.mxu0 %v1205
    %1256 = vmatprep.subr.bf16.mxu0 0
    %1257 = vmatpush1.bf16.msra.mxu0 %v1206
    %1258 = vmatprep.subr.bf16.mxu0 0
    %1259 = vmatpush1.bf16.msra.mxu0 %v1207
    %1260 = vmatprep.subr.bf16.mxu0 0
    %1261 = vmatpush1.bf16.msra.mxu0 %v1208
    %1262 = vmatprep.subr.bf16.mxu0 0
    %1263 = vmatpush1.bf16.msra.mxu0 %v1209
    %1264 = vmatprep.subr.bf16.mxu0 0
    %1265 = vmatpush1.bf16.msra.mxu0 %v1210
    %1266 = vmatprep.subr.bf16.mxu0 0
    %1267 = vmatpush1.bf16.msra.mxu0 %v1211
    %1268 = vmatprep.subr.bf16.mxu0 0
    %1269 = vmatpush1.bf16.msra.mxu0 %v1212
    %1270 = vmatprep.subr.bf16.mxu0 0
    %1271 = vmatpush1.bf16.msra.mxu0 %v1213
    %1272 = vmatprep.subr.bf16.mxu0 0
    %1273 = vmatpush1.bf16.msra.mxu0 %v1214
    %1274 = vmatprep.subr.bf16.mxu0 0
    %1275 = vmatpush1.bf16.msra.mxu0 %v1215
    %1276 = vmatprep.subr.bf16.mxu0 0
    %1277 = vmatpush1.bf16.msra.mxu0 %v1216
    %1278 = vmatprep.subr.bf16.mxu0 0
    %1279 = vmatpush1.bf16.msra.mxu0 %v1217
    %1280 = vmatprep.subr.bf16.mxu0 0
    %1281 = vmatpush1.bf16.msra.mxu0 %v1218
    %1282 = vmatprep.subr.bf16.mxu0 0
    %1283 = vmatpush1.bf16.msra.mxu0 %v1219
    %1284 = vmatprep.mubr.bf16.mxu0 %v1048
    %1285 = vmatmul.mubr.bf16.gmra.mrb[0].mxu0 %v1047
    %v1286 = vpop.f32.mrb[0].mxu0
    %v1287 = vadd.f32 %v1106, %v1286
    %v1288 = vpop.f32.mrb[0].mxu0
    %v1289 = vpop.f32.mrb[0].mxu0
    %v1290 = vpop.f32.mrb[0].mxu0
    %1291 = vdwg.mxu0
    %1292 = vmatprep.subr.bf16.mxu0 0
    %1293 = vmatpush1.bf16.msra.mxu0 %v1220
    %1294 = vmatprep.subr.bf16.mxu0 0
    %1295 = vmatpush1.bf16.msra.mxu0 %v1221
    %1296 = vmatprep.subr.bf16.mxu0 0
    %1297 = vmatpush1.bf16.msra.mxu0 %v1222
    %1298 = vmatprep.subr.bf16.mxu0 0
    %1299 = vmatpush1.bf16.msra.mxu0 %v1223
    %1300 = vmatprep.subr.bf16.mxu0 0
    %1301 = vmatpush1.bf16.msra.mxu0 %v1224
    %1302 = vmatprep.subr.bf16.mxu0 0
    %1303 = vmatpush1.bf16.msra.mxu0 %v1225
    %1304 = vmatprep.subr.bf16.mxu0 0
    %1305 = vmatpush1.bf16.msra.mxu0 %v1226
    %1306 = vmatprep.subr.bf16.mxu0 0
    %1307 = vmatpush1.bf16.msra.mxu0 %v1227
    %1308 = vmatprep.subr.bf16.mxu0 0
    %1309 = vmatpush1.bf16.msra.mxu0 0
    %1310 = vmatprep.subr.bf16.mxu0 0
    %1311 = vmatpush1.bf16.msra.mxu0 0
    %1312 = vmatprep.subr.bf16.mxu0 0
    %1313 = vmatpush1.bf16.msra.mxu0 0
    %1314 = vmatprep.subr.bf16.mxu0 0
    %1315 = vmatpush1.bf16.msra.mxu0 0
    %1316 = vmatprep.subr.bf16.mxu0 0
    %1317 = vmatpush1.bf16.msra.mxu0 0
    %1318 = vmatprep.subr.bf16.mxu0 0
    %1319 = vmatpush1.bf16.msra.mxu0 0
    %1320 = vmatprep.subr.bf16.mxu0 0
    %1321 = vmatpush1.bf16.msra.mxu0 0
    %1322 = vmatprep.subr.bf16.mxu0 0
    %1323 = vmatpush1.bf16.msra.mxu0 0
    %1324 = vmatprep.mubr.bf16.mxu0 0
    %1325 = vmatmul.mubr.bf16.gmra.mrb[0].mxu0 %v1049
    %v1326 = vpop.f32.mrb[0].mxu0
    %v1327 = vadd.f32 %v1287, %v1326
    %v1328 = vpop.f32.mrb[0].mxu0
    %v1329 = vpop.f32.mrb[0].mxu0
    %v1330 = vpop.f32.mrb[0].mxu0
    %1331 = vdwg.mxu0
    %1332 = vst [vmem:[#allocation11] sm:$0xff] %v1327
    // Predicated region
    $region46: #{tpu_custom_call.1} parent=1 // pred_check
      _
    $region47: #{tpu_custom_call.1} parent=1 // pred_check_branch
      %1334 = sbr.rel (0) target = $region49
    $region48: #{tpu_custom_call.1} parent=1 // pred_region
      %s1336 = ssub.s32 128, 128
      %1337 = vsyncadd [#allocation5], %s1336
      %s1339 = sshll.u32 [#allocation11], 4
      %s1340 = int_to_ptr.vmem [resolvable:$true] %s1339
      %1342 = dma.vmem_to_hbm [thread:$0]  %s1340, 128, %s7, [#allocation5]
    $region49: #{tpu_custom_call.1} parent=1 // pred_fallthru
      _
    // Predicated region
    $region50: #{tpu_custom_call.1} parent=1 // pred_check
      _
    $region51: #{tpu_custom_call.1} parent=1 // pred_check_branch
      %1344 = sbr.rel (0) target = $region53
    $region52: #{tpu_custom_call.1} parent=1 // pred_region
      %1345 = dma.done [#allocation5], 128
    $region53: #{tpu_custom_call.1} parent=1 // pred_fallthru
      _
    %1346 = vsyncpa [#allocation4], 1
    %1347 = vsyncpa [#allocation7], 1
    %1348 = vsyncpa [#allocation10], 1
    %1349 = vsyncpa [#allocation5], 1

</llo_original>
